<compile_context>
chip_gen: v5e
topology: v5e:2x2
jax: 0.10.0
libtpu: 0.0.40
codegen_flags: <defaults>
</compile_context>

<pallas_src>
import math

import jax
import jax.numpy as jnp
from jax.experimental import pallas as pl
from jax.experimental.pallas import tpu as pltpu


def _round_up(a, m):
    return ((a + m - 1) // m) * m


def _pad_last2(a, rows, cols):
    pr = rows - a.shape[-2]
    pc = cols - a.shape[-1]
    if pr == 0 and pc == 0:
        return a
    pad = [(0, 0)] * (a.ndim - 2) + [(0, pr), (0, pc)]
    return jnp.pad(a, pad)


# -----------------------------------------------------------------------------
# pre_sup = x @ W0, hoisted into its own tiny pallas_call so the pipelined
# support loop has no cold first-iteration branch and pre_sup can be tiled
# along the contraction axis of the main kernel.
# -----------------------------------------------------------------------------
def _xw_kernel(x_ref, w_ref, o_ref):
    o_ref[...] = jnp.dot(
        x_ref[...], w_ref[...], preferred_element_type=jnp.float32
    ).astype(o_ref.dtype)


def _pre_sup_matmul(x_p, w_p, tm):
    n_p, d_in = x_p.shape
    d_out_p = w_p.shape[1]
    return pl.pallas_call(
        _xw_kernel,
        out_shape=jax.ShapeDtypeStruct((n_p, d_out_p), jnp.float32),
        grid_spec=pltpu.PrefetchScalarGridSpec(
            num_scalar_prefetch=0,
            grid=(n_p // tm,),
            in_specs=[
                pl.BlockSpec((tm, d_in), lambda i: (i, 0)),
                # W0 is resident across the grid (constant index_map).
                pl.BlockSpec((d_in, d_out_p), lambda i: (0, 0)),
            ],
            out_specs=pl.BlockSpec((tm, d_out_p), lambda i: (i, 0)),
        ),
        compiler_params=pltpu.CompilerParams(
            dimension_semantics=("parallel",)
        ),
    )(x_p, w_p)


# -----------------------------------------------------------------------------
# out = (sum_s support[s]) @ pre_sup
# -----------------------------------------------------------------------------
def _gcn_kernel(sup_ref, pre_ref, out_ref, sup_acc_ref):
    k = pl.program_id(1)
    s = pl.program_id(2)

    # First visit of this output row-tile: zero the (resident) output block.
    @pl.when((k == 0) & (s == 0))
    def _():
        out_ref[...] = jnp.zeros_like(out_ref)

    # VPU-accumulate the support tiles over the innermost s axis (overlaps
    # with the DMA of the next support tile).
    @pl.when(s == 0)
    def _():
        sup_acc_ref[...] = sup_ref[...].astype(jnp.float32)

    @pl.when(s > 0)
    def _():
        sup_acc_ref[...] += sup_ref[...].astype(jnp.float32)

    # One MXU matmul per (row-tile, k-tile) once all supports are summed;
    # accumulate directly into the resident f32 output block.
    @pl.when(s == pl.num_programs(2) - 1)
    def _():
        out_ref[...] += jnp.dot(
            sup_acc_ref[...].astype(pre_ref.dtype),
            pre_ref[...],
            preferred_element_type=jnp.float32,
        ).astype(out_ref.dtype)


def graph_convolution(
    supports, x, w, *, featureless=False, tm=256, tk=512, compute_dtype=None
):
    """GCN layer forward.

    supports: (S, N, N) dense adjacency matrices.
    x:        (N, D_in) node features (ignored when featureless=True).
    w:        (D_in, D_out) weight W0 (the module always uses W0).
    compute_dtype: optionally cast supports / pre_sup (e.g. jnp.bfloat16) for
      the support @ pre_sup matmul; accumulation stays f32.
    Returns (N, D_out) float32.
    """
    S, N, _ = supports.shape
    D_out = w.shape[1]

    # Lane-dense output dim (multiple of 128) -> unmasked vector stores.
    d_out_p = _round_up(D_out, 128)
    # Cap tiles for small problems; pad N so both tilings divide evenly.
    tm = min(tm, _round_up(N, 8))
    tk = min(tk, _round_up(N, 128))
    n_p = _round_up(N, math.lcm(tm, tk))

    w_p = _pad_last2(w, w.shape[0], d_out_p)

    if featureless:
        if w.shape[0] != N:
            raise ValueError("featureless=True requires w.shape[0] == N")
        pre_p = _pad_last2(w_p, n_p, d_out_p).astype(jnp.float32)
    else:
        x_p = _pad_last2(x, n_p, x.shape[1])
        pre_p = _pre_sup_matmul(x_p, w_p, tm)

    sup_p = _pad_last2(supports, n_p, n_p)

    if compute_dtype is not None:
        pre_p = pre_p.astype(compute_dtype)
        sup_p = sup_p.astype(compute_dtype)

    out_p = pl.pallas_call(
        _gcn_kernel,
        out_shape=jax.ShapeDtypeStruct((n_p, d_out_p), jnp.float32),
        grid_spec=pltpu.PrefetchScalarGridSpec(
            num_scalar_prefetch=0,
            grid=(n_p // tm, n_p // tk, S),
            in_specs=[
                # support tile: squeezed leading S dim -> clean 2-D VMEM view.
                pl.BlockSpec(
                    (pl.Squeezed(), tm, tk), lambda i, k, s: (s, i, k)
                ),
                # pre_sup tile along the contraction (k) axis.
                pl.BlockSpec((tk, d_out_p), lambda i, k, s: (k, 0)),
            ],
            # Output row-tile is resident across both reduction axes (k, s)
            # and doubles as the f32 accumulator.
            out_specs=pl.BlockSpec((tm, d_out_p), lambda i, k, s: (i, 0)),
            scratch_shapes=[
                pltpu.VMEM((tm, tk), jnp.float32),  # summed-support tile
            ],
        ),
        compiler_params=pltpu.CompilerParams(
            # Row tiles shard across TensorCores (v7x megacore); the two
            # reduction axes stay serial, with S innermost.
            dimension_semantics=("parallel", "arbitrary", "arbitrary"),
        ),
    )(sup_p, pre_p)

    # TODO(synk): dropout (rate 0.0 -> identity), bias=False and act_func=None
    # are the only (default) paths wired up; a non-default bias/activation
    # would be a trivial epilogue on the output tile.
    return out_p[:N, :D_out]


if __name__ == "__main__":
    # Small, deterministic problem: 64 nodes, 32 input features, 16 output
    # features, 2 support matrices.
    key = jax.random.PRNGKey(0)
    k_sup, k_x, k_w, k_w2 = jax.random.split(key, 4)

    S, N, D_in, D_out = 2, 64, 32, 16

    supports = jax.random.normal(k_sup, (S, N, N), dtype=jnp.float32)
    x = jax.random.normal(k_x, (N, D_in), dtype=jnp.float32)
    w = jax.random.normal(k_w, (D_in, D_out), dtype=jnp.float32)

    out = graph_convolution(supports, x, w)
    out = jax.block_until_ready(out)

    # Reference (plain JAX), matching the PyTorch forward.
    pre_sup = x @ w
    ref = sum(supports[i] @ pre_sup for i in range(S))
    assert out.shape == (N, D_out)
    assert jnp.allclose(out, ref, atol=1e-3, rtol=1e-3), "mismatch vs reference"

    # featureless=True path: pre_sup = W0 (requires input_dim == N).
    w2 = jax.random.normal(k_w2, (N, D_out), dtype=jnp.float32)
    out_fl = graph_convolution(supports, x, w2, featureless=True)
    out_fl = jax.block_until_ready(out_fl)
    ref_fl = sum(supports[i] @ w2 for i in range(S))
    assert jnp.allclose(out_fl, ref_fl, atol=1e-3, rtol=1e-3), (
        "featureless mismatch vs reference"
    )

    print("KERNEL_OK")
</pallas_src>

<mosaic_0001>
module attributes {stable_mosaic.version = 11 : i64} {
  func.func @_xw_kernel(%arg0: i32, %arg1: memref<64x32xf32, #tpu.memory_space<vmem>>, %arg2: memref<32x128xf32, #tpu.memory_space<vmem>>, %arg3: memref<64x128xf32, #tpu.memory_space<vmem>>) attributes {dimension_semantics = [#tpu.dimension_semantics<parallel>], iteration_bounds = array<i64: 2>, scalar_prefetch = 0 : i64, scratch_operands = 0 : i64, tpu.core_type = #tpu.core_type<tc>, window_params = [{transform_indices = @transform_0, window_bounds = array<i64: 64, 32>}, {pipeline_mode = #tpu.pipeline_mode<synchronous>, transform_indices = @transform_1, window_bounds = array<i64: 32, 128>}, {transform_indices = @transform_2, window_bounds = array<i64: 64, 128>}]} {
    %c0 = arith.constant 0 : index
    %c0_0 = arith.constant 0 : index
    %0 = vector.load %arg1[%c0, %c0_0] : memref<64x32xf32, #tpu.memory_space<vmem>>, vector<64x32xf32>
    %c0_1 = arith.constant 0 : index
    %c0_2 = arith.constant 0 : index
    %1 = vector.load %arg2[%c0_1, %c0_2] : memref<32x128xf32, #tpu.memory_space<vmem>>, vector<32x128xf32>
    %cst = arith.constant dense<0.000000e+00> : vector<64x128xf32>
    %2 = tpu.matmul %0, %1, %cst {dimension_numbers = #tpu.dot_dimension_numbers<[1], [0], [0], [1], [0, 0, 1, 1], [], []>} : vector<64x32xf32>, vector<32x128xf32>, vector<64x128xf32> -> vector<64x128xf32>
    %c0_3 = arith.constant 0 : index
    %c0_4 = arith.constant 0 : index
    %3 = vector.load %arg3[%c0_3, %c0_4] : memref<64x128xf32, #tpu.memory_space<vmem>>, vector<64x128xf32>
    tpu.vector_store %arg3[%c0_3, %c0_4], %2 {strides = array<i32>} : memref<64x128xf32, #tpu.memory_space<vmem>>, vector<64x128xf32>,
    return
  }
  func.func @transform_0(%arg0: i32) -> (i32, i32) {
    %c0_i32 = arith.constant 0 : i32
    %c0_i32_0 = arith.constant 0 : i32
    return %arg0, %c0_i32 : i32, i32
  }
  func.func @transform_1(%arg0: i32) -> (i32, i32) {
    %c0_i32 = arith.constant 0 : i32
    %c0_i32_0 = arith.constant 0 : i32
    %c0_i32_1 = arith.constant 0 : i32
    return %c0_i32, %c0_i32_0 : i32, i32
  }
  func.func @transform_2(%arg0: i32) -> (i32, i32) {
    %c0_i32 = arith.constant 0 : i32
    %c0_i32_0 = arith.constant 0 : i32
    return %arg0, %c0_i32 : i32, i32
  }
}

</mosaic_0001>

<llo_original>
// kernel: tpu_custom_call.1
$region0: #{tpu_custom_call.1}
  #allocation0 [shape = 'u32[]', space=smem, size = 0x4, offset = 0x4, fixed_abs, tag = 'smem constant byte address 0x4 - core index']
  #allocation1 [shape = 'u32[72,128]{1,0:T(1,128)}', space=vmem, size = 0x9000, scoped, tag = 'internal scratch']
  %s0 = inlined_call_operand.vmem [shape: f32[128,32], index: 0, kind: input, shape index: {}]
  %s1 = inlined_call_operand.vmem [shape: f32[32,128], index: 1, kind: input, shape index: {}]
  %s2 = inlined_call_operand.hbm [shape: f32[128,128], index: 2, kind: output, shape index: {}]
  %s3 = sld [smem:[#allocation0]]
  $region41: #{tpu_custom_call.1} parent=0
    _
  %s5 = ssub.s32 1, %s3
  %s6 = scalar_select 0, %s5, %s3
  $region1: #{tpu_custom_call.1} parent=0
    #allocation2 [shape = 'u8[65536]{0}', space=vmem, size = 0x10000, scoped, tag = 'output window, operand 0']
    #allocation3 [shape = 's32[2]{0}', space=sflag, size = 0x8, scoped, tag = 'scoped memory for tpu_custom_call.1']
    %7 = vsyncpa [#allocation3], 0
    %s8 = scalar_lea.sflag [#allocation3], 1
    %9 = vsyncpa %s8, 0
    loop: start=0, step=1, limit=4
    $region2: #{tpu_custom_call.1} parent=1 // loop_pre_header
      _
    $region3: #{tpu_custom_call.1} parent=1 // loop_header
      %s11 = sphi 0, %s15
      %p12 = scmp.ge.s32.totalorder %s11, 4
      %s21 = sphi 0, %s23
      %s24 = sphi 0, %s21
      %s25 = sphi 0, %s24
      %s41 = sphi 0, %s25
      %s45 = sphi 0, %s45
      %s47 = sphi 0, %s45
      %s48 = sphi 0, %s47
      %s62 = sphi 0, %s48
      %s68 = sphi 0, %s70
      %s71 = sphi 0, %s68
      %s72 = sphi 0, %s71
      %s88 = sphi 0, %s72
    $region4: #{tpu_custom_call.1} parent=1 // loop_header_branch
      %14 = sbr.rel (%p12) target = $region8
    $region5: #{tpu_custom_call.1} parent=1 // loop_body
      %s16 = ssub.s32 %s11, 1
      %s17 = ssub.s32 %s11, 2
      %s18 = sadd.s32 %s11, 1
      %s19 = ssub.s32 %s11, %s18
      %p20 = scmp.eq.s32.totalorder %s19, 0
      %s22 = sadd.s32 %s21, 1
      %s23 = scalar_select %p20, %s21, %s22
      %p26 = pneg %p20
      %p27 = scmp.eq.s32.totalorder %s11, 1
      %p28 = por %p26, %p27
      %p29 = scmp.ne.s32.totalorder %s21, %s24
      %p30 = scmp.eq.s32.totalorder %s11, 0
      %p31 = por %p29, %p30
      %p32 = scmp.ne.s32.totalorder %s21, %s24
      %p33 = scmp.eq.s32.totalorder %s16, 1
      %p34 = por %p32, %p33
      %p35 = scmp.ne.s32.totalorder %s24, %s25
      %p36 = scmp.eq.s32.totalorder %s16, 0
      %p37 = por %p35, %p36
      %p38 = scmp.ne.s32.totalorder %s24, %s25
      %p39 = scmp.eq.s32.totalorder %s17, 1
      %p40 = por %p38, %p39
      %p42 = scmp.ne.s32.totalorder %s25, %s41
      %p43 = scmp.eq.s32.totalorder %s17, 0
      %p44 = por %p42, %p43
      %s46 = sadd.s32 %s45, 1
      %p49 = scmp.eq.s32.totalorder %s11, 1
      %p50 = scmp.ne.s32.totalorder %s45, %s47
      %p51 = scmp.eq.s32.totalorder %s11, 0
      %p52 = por %p50, %p51
      %p53 = scmp.ne.s32.totalorder %s45, %s47
      %p54 = scmp.eq.s32.totalorder %s16, 1
      %p55 = por %p53, %p54
      %p56 = scmp.ne.s32.totalorder %s47, %s48
      %p57 = scmp.eq.s32.totalorder %s16, 0
      %p58 = por %p56, %p57
      %p59 = scmp.ne.s32.totalorder %s47, %s48
      %p60 = scmp.eq.s32.totalorder %s17, 1
      %p61 = por %p59, %p60
      %p63 = scmp.ne.s32.totalorder %s48, %s62
      %p64 = scmp.eq.s32.totalorder %s17, 0
      %p65 = por %p63, %p64
      %s66 = ssub.s32 %s11, %s18
      %p67 = scmp.eq.s32.totalorder %s66, 0
      %s69 = sadd.s32 %s68, 1
      %s70 = scalar_select %p67, %s68, %s69
      %p73 = pneg %p67
      %p74 = scmp.eq.s32.totalorder %s11, 1
      %p75 = por %p73, %p74
      %p76 = scmp.ne.s32.totalorder %s68, %s71
      %p77 = scmp.eq.s32.totalorder %s11, 0
      %p78 = por %p76, %p77
      %p79 = scmp.ne.s32.totalorder %s68, %s71
      %p80 = scmp.eq.s32.totalorder %s16, 1
      %p81 = por %p79, %p80
      %p82 = scmp.ne.s32.totalorder %s71, %s72
      %p83 = scmp.eq.s32.totalorder %s16, 0
      %p84 = por %p82, %p83
      %p85 = scmp.ne.s32.totalorder %s71, %s72
      %p86 = scmp.eq.s32.totalorder %s17, 1
      %p87 = por %p85, %p86
      %p89 = scmp.ne.s32.totalorder %s72, %s88
      %p90 = scmp.eq.s32.totalorder %s17, 0
      %p91 = por %p89, %p90
      %p92 = scmp.le.s32.totalorder 1, %s11
      %p93 = scmp.lt.s32.totalorder %s11, 3
      %p94 = pnand %p92, %p93
      %p95 = pneg %p94
      // Predicated region
      $region9: #{tpu_custom_call.1} parent=5 // pred_check
        _
      $region10: #{tpu_custom_call.1} parent=5 // pred_check_branch
        %97 = sbr.rel (%p94) target = $region12
      $region11: #{tpu_custom_call.1} parent=5 // pred_region
        %s98 = ssub.s32 %s11, 1
        // Predicated region
        $region13: #{tpu_custom_call.1} parent=11 // pred_check
          %p99 = pneg %p58
        $region14: #{tpu_custom_call.1} parent=11 // pred_check_branch
          %101 = sbr.rel (%p99) target = $region16
        $region15: #{tpu_custom_call.1} parent=11 // pred_region
          _
        $region16: #{tpu_custom_call.1} parent=11 // pred_fallthru
          _
      $region12: #{tpu_custom_call.1} parent=5 // pred_fallthru
        _
      %p102 = scmp.lt.s32.totalorder %s11, 2
      // Predicated region
      $region17: #{tpu_custom_call.1} parent=5 // pred_check
        %p103 = pneg %p102
      $region18: #{tpu_custom_call.1} parent=5 // pred_check_branch
        %105 = sbr.rel (%p103) target = $region20
      $region19: #{tpu_custom_call.1} parent=5 // pred_region
        // Predicated region
        $region21: #{tpu_custom_call.1} parent=19 // pred_check
          %p106 = pneg %p31
        $region22: #{tpu_custom_call.1} parent=19 // pred_check_branch
          %108 = sbr.rel (%p106) target = $region24
        $region23: #{tpu_custom_call.1} parent=19 // pred_region
          %s109 = smul.u32 8, %s11
          %p110 = scmp.lt.s32.totalorder %s109, 15
          %s111 = scalar_select %p110, %s109, 15
          %s112 = smul.addr %s111, 8
          %s113 = scalar_lea.vmem %s0, %s112
          %s114 = smul.u32 8, %s11
        $region24: #{tpu_custom_call.1} parent=19 // pred_fallthru
          _
      $region20: #{tpu_custom_call.1} parent=5 // pred_fallthru
        _
      %p115 = scmp.le.s32.totalorder 1, %s11
      %p116 = scmp.lt.s32.totalorder %s11, 3
      %p117 = pnand %p115, %p116
      %p118 = pneg %p117
      // Predicated region
      $region25: #{tpu_custom_call.1} parent=5 // pred_check
        _
      $region26: #{tpu_custom_call.1} parent=5 // pred_check_branch
        %120 = sbr.rel (%p117) target = $region28
      $region27: #{tpu_custom_call.1} parent=5 // pred_region
        %s121 = ssub.s32 %s11, 1
        %s122 = smul.u32 8, %s16
        %p123 = scmp.lt.s32.totalorder %s122, 15
        %s124 = scalar_select %p123, %s122, 15
        %s125 = smul.addr %s124, 8
        %s126 = scalar_lea.vmem %s0, %s125
        %p127 = pneg %p37
        %p128 = pneg %p34
        %p129 = pneg %p58
        %p130 = pneg %p55
        %p131 = pneg %p84
        %p132 = pneg %p81
        %s133 = sand.u32 %s71, 1
        %s134 = scalar_lea.sflag [#allocation3], %s133
        %s135 = sand.u32 %s71, 1
        %s136 = smul.addr %s135, 64
        %s137 = scalar_lea.vmem [#allocation2], %s136
        %s138 = smul.u32 8, %s16
        %p139 = scmp.lt.s32.totalorder %s138, 15
        %s140 = scalar_select %p139, %s138, 15
        %s141 = smul.addr %s140, 8
        %s142 = scalar_lea.vmem %s0, %s141
        %s143 = smul.u32 8, %s16
        %s144 = smul.u32 8, %s16
        %v145 = vld [vmem:[%s142] sm:$0xff]
        %v146 = vld [vmem:[%s142 + $0x8] sm:$0xff]
        %v147 = vld [vmem:[%s142 + $0x10] sm:$0xff]
        %v148 = vld [vmem:[%s142 + $0x18] sm:$0xff]
        %v149 = vld [vmem:[%s142 + $0x20] sm:$0xff]
        %v150 = vld [vmem:[%s142 + $0x28] sm:$0xff]
        %v151 = vld [vmem:[%s142 + $0x30] sm:$0xff]
        %v152 = vld [vmem:[%s142 + $0x38] sm:$0xff]
        %v153 = vld [vmem:[%s1] sm:$0xff]
        %v154 = vld [vmem:[%s1 + $0x8] sm:$0xff]
        %v155 = vld [vmem:[%s1 + $0x10] sm:$0xff]
        %v156 = vld [vmem:[%s1 + $0x18] sm:$0xff]
        %vm157 = vcmask 261120
        %v159 = vsel %vm157, %v145, 0
        %v162 = vsel %vm157, %v146, 0
        %v165 = vsel %vm157, %v147, 0
        %v168 = vsel %vm157, %v148, 0
        %v171 = vsel %vm157, %v149, 0
        %v174 = vsel %vm157, %v150, 0
        %v177 = vsel %vm157, %v151, 0
        %v180 = vsel %vm157, %v152, 0
        %182 = vmatpush.msra.mxu0 0.0
        %183 = vmatpush.msra.mxu0 0.0
        %184 = vmatpush.msra.mxu0 0.0
        %185 = vmatpush.msra.mxu0 0.0
        %186 = vmatpush.msra.mxu0 0.0
        %187 = vmatpush.msra.mxu0 0.0
        %188 = vmatpush.msra.mxu0 0.0
        %189 = vmatpush.msra.mxu0 0.0
        %190 = vmatpush.msra.mxu0 0.0
        %191 = vmatpush.msra.mxu0 0.0
        %192 = vmatpush.msra.mxu0 0.0
        %193 = vmatpush.msra.mxu0 0.0
        %194 = vmatpush.msra.mxu0 %v156
        %195 = vmatpush.msra.mxu0 %v155
        %196 = vmatpush.msra.mxu0 %v154
        %197 = vmatpush.msra.mxu0 %v153
        %198 = vmatmul.f32.gmra.mxu0 %v159
        %v199 = vpop.f32.mrf.mxu0
        %v200 = vadd.f32 0.0, %v199
        %201 = vmatmul.f32.gmra.mxu0 %v162
        %v202 = vpop.f32.mrf.mxu0
        %v203 = vadd.f32 0.0, %v202
        %204 = vmatmul.f32.gmra.mxu0 %v165
        %v205 = vpop.f32.mrf.mxu0
        %v206 = vadd.f32 0.0, %v205
        %207 = vmatmul.f32.gmra.mxu0 %v168
        %v208 = vpop.f32.mrf.mxu0
        %v209 = vadd.f32 0.0, %v208
        %210 = vmatmul.f32.gmra.mxu0 %v171
        %v211 = vpop.f32.mrf.mxu0
        %v212 = vadd.f32 0.0, %v211
        %213 = vmatmul.f32.gmra.mxu0 %v174
        %v214 = vpop.f32.mrf.mxu0
        %v215 = vadd.f32 0.0, %v214
        %216 = vmatmul.f32.gmra.mxu0 %v177
        %v217 = vpop.f32.mrf.mxu0
        %v218 = vadd.f32 0.0, %v217
        %219 = vmatmul.f32.gmra.mxu0 %v180
        %v220 = vpop.f32.mrf.mxu0
        %v221 = vadd.f32 0.0, %v220
        %222 = vdwg.mxu0
        %223 = vst [vmem:[%s137] sm:$0xff] %v200
        %224 = vst [vmem:[%s137 + $0x8] sm:$0xff] %v203
        %225 = vst [vmem:[%s137 + $0x10] sm:$0xff] %v206
        %226 = vst [vmem:[%s137 + $0x18] sm:$0xff] %v209
        %227 = vst [vmem:[%s137 + $0x20] sm:$0xff] %v212
        %228 = vst [vmem:[%s137 + $0x28] sm:$0xff] %v215
        %229 = vst [vmem:[%s137 + $0x30] sm:$0xff] %v218
        %230 = vst [vmem:[%s137 + $0x38] sm:$0xff] %v221
        %s231 = sand.u32 %s71, 1
        %s232 = scalar_lea.sflag [#allocation3], %s231
        %s233 = sand.u32 %s71, 1
        %s234 = smul.addr %s233, 64
        %s235 = scalar_lea.vmem [#allocation2], %s234
        // Predicated region
        $region29: #{tpu_custom_call.1} parent=27 // pred_check
          %p236 = pneg %p81
        $region30: #{tpu_custom_call.1} parent=27 // pred_check_branch
          %238 = sbr.rel (%p236) target = $region32
        $region31: #{tpu_custom_call.1} parent=27 // pred_region
          %s239 = smul.u32 8, %s16
          %241 = vsyncadd %s232, 0
          %s242 = smul.addr %s239, 8
          %s243 = scalar_lea.hbm %s2, %s242
          %s244 = sshll.u32 %s235, 4
          %s245 = int_to_ptr.vmem [resolvable:$true] %s244
          %s246 = sshll.u32 %s243, 4
          %s247 = int_to_ptr.hbm [resolvable:$true] %s246
          %252 = dma.vmem_to_hbm [thread:$0]  %s245, 1024, %s247, %s232, 128, 128, 8
        $region32: #{tpu_custom_call.1} parent=27 // pred_fallthru
          _
      $region28: #{tpu_custom_call.1} parent=5 // pred_fallthru
        _
      %p253 = scmp.le.s32.totalorder 2, %s11
      // Predicated region
      $region33: #{tpu_custom_call.1} parent=5 // pred_check
        %p254 = pneg %p253
      $region34: #{tpu_custom_call.1} parent=5 // pred_check_branch
        %256 = sbr.rel (%p254) target = $region36
      $region35: #{tpu_custom_call.1} parent=5 // pred_region
        %s257 = ssub.s32 %s11, 2
        // Predicated region
        $region37: #{tpu_custom_call.1} parent=35 // pred_check
          %p258 = pneg %p87
        $region38: #{tpu_custom_call.1} parent=35 // pred_check_branch
          %260 = sbr.rel (%p258) target = $region40
        $region39: #{tpu_custom_call.1} parent=35 // pred_region
          %s261 = sand.u32 %s72, 1
          %s262 = scalar_lea.sflag [#allocation3], %s261
          %s263 = sand.u32 %s72, 1
          %s264 = smul.addr %s263, 64
          %s265 = scalar_lea.vmem [#allocation2], %s264
          %267 = dma.done %s262, 1024
        $region40: #{tpu_custom_call.1} parent=35 // pred_fallthru
          _
      $region36: #{tpu_custom_call.1} parent=5 // pred_fallthru
        _
    $region6: #{tpu_custom_call.1} parent=1 // loop_footer
      %s15 = sadd.s32 1, %s11
    $region7: #{tpu_custom_call.1} parent=1 // loop_footer_branch
      %10 = sbr.rel target = $region3
    $region8: #{tpu_custom_call.1} parent=1 // loop_exit
      _
    %268 = vsyncpa [#allocation3], 1
    %s269 = scalar_lea.sflag [#allocation3], 1
    %270 = vsyncpa %s269, 1

</llo_original>
